<compile_context>
chip_gen: v5e
topology: v5e:2x2
jax: 0.10.0
libtpu: 0.0.40
codegen_flags: <defaults>
</compile_context>

<pallas_src>
from math import sqrt

import jax
import jax.numpy as jnp
from jax import lax
from jax.experimental import pallas as pl
from jax.experimental.pallas import tpu as pltpu

_NEG_INIT = -1e30                      # finite "-inf": exp(m_prev-m_new) never NaNs
_VMEM_LIMIT = 48 * 1024 * 1024         # scoped VMEM cap (<= v7x 64 MiB physical)
_VMEM_BUDGET = 40 * 1024 * 1024        # target working set (headroom under limit)


def _round_up(x, m):
    return ((x + m - 1) // m) * m


def _pick_tile(dim, target, multiple):
    """Largest tile <= target that divides `dim` and is a multiple of `multiple`
    (falls back to the full dim, which is always a legal block size)."""
    if dim <= target:
        return dim
    t = (target // multiple) * multiple
    while t >= multiple:
        if dim % t == 0:
            return t
        t -= multiple
    # TODO(synk): ragged dims fall back to a full-size block; pad inputs (or use
    #             pl.BoundedSlice) if that ever exceeds the VMEM budget.
    return dim


# ---------------------------------------------------------------------------
# Projection kernel: (rows, d_model) @ (d_model, n_out) -> (rows, n_out)
# d_model is tiled (grid axis 1, "arbitrary") with an f32 VMEM accumulator.
# ---------------------------------------------------------------------------
def _proj_kernel(x_ref, w_ref, o_ref, acc_ref):
    @pl.when(pl.program_id(1) == 0)
    def _init():
        acc_ref[...] = jnp.zeros_like(acc_ref)

    acc_ref[...] += lax.dot_general(
        x_ref[...].astype(jnp.bfloat16), w_ref[...],
        dimension_numbers=(((1,), (0,)), ((), ())),
        preferred_element_type=jnp.float32)

    @pl.when(pl.program_id(1) == pl.num_programs(1) - 1)
    def _store():
        o_ref[...] = acc_ref[...].astype(o_ref.dtype)


def _proj_tiles(rows, d_model, n_out, in_bytes):
    tk = _pick_tile(d_model, 2048, 128)
    for target in (1024, 512, 256, 128, 64, 32, 16, 8):
        tm = _pick_tile(rows, target, 8)
        est = (2 * tm * tk * in_bytes      # input blocks (double-buffered)
               + 2 * tk * n_out * 2        # weight blocks (bf16)
               + 2 * tm * n_out * 2        # output blocks (bf16)
               + tm * n_out * 4)           # f32 accumulator
        if est <= _VMEM_BUDGET:
            return tm, tk
    return _pick_tile(rows, 8, 8), tk


def _project(x, w_t):
    """x: (B, L, d_model) f32/bf16; w_t: (d_model, n_out) bf16 -> (B, L, n_out) bf16."""
    B, L, d_model = x.shape
    n_out = w_t.shape[1]
    rows = B * L
    x2 = x.reshape(rows, d_model)
    tm, tk = _proj_tiles(rows, d_model, n_out, jnp.dtype(x.dtype).itemsize)
    out = pl.pallas_call(
        _proj_kernel,
        out_shape=jax.ShapeDtypeStruct((rows, n_out), jnp.bfloat16),
        grid_spec=pltpu.PrefetchScalarGridSpec(
            num_scalar_prefetch=0,
            grid=(rows // tm, d_model // tk),
            in_specs=[pl.BlockSpec((tm, tk), lambda i, k: (i, k)),
                      pl.BlockSpec((tk, n_out), lambda i, k: (k, 0))],
            out_specs=pl.BlockSpec((tm, n_out), lambda i, k: (i, 0)),
            scratch_shapes=[pltpu.VMEM((tm, n_out), jnp.float32)]),
        compiler_params=pltpu.CompilerParams(
            dimension_semantics=("parallel", "arbitrary"),
            vmem_limit_bytes=_VMEM_LIMIT),
    )(x2, w_t)
    return out.reshape(B, L, n_out)


# ---------------------------------------------------------------------------
# Flash attention kernel (online softmax over kv tiles; kv axis innermost)
# ---------------------------------------------------------------------------
def _attn_step(q_ref, k_ref, v_ref, mask_ref, o_ref, m_ref, l_ref, acc_ref):
    kv = pl.program_id(2)

    @pl.when(kv == 0)
    def _init():
        m_ref[...] = jnp.full_like(m_ref, _NEG_INIT)
        l_ref[...] = jnp.zeros_like(l_ref)
        acc_ref[...] = jnp.zeros_like(acc_ref)

    q = q_ref[0]        # (tq, d_pad) bf16 (scale pre-folded into Wq)
    k = k_ref[0]        # (tk, d_pad) bf16
    v = v_ref[0]        # (tk, d_pad) bf16

    # Contract on the shared d_pad axis directly (no k.T through the XLU).
    s = lax.dot_general(q, k, dimension_numbers=(((1,), (1,)), ((), ())),
                        preferred_element_type=jnp.float32)
    if mask_ref is not None:
        s = s + mask_ref[0]          # f32 mask; (1, tk) key-pad masks broadcast

    m_prev = m_ref[...]
    m_new = jnp.maximum(m_prev, jnp.max(s, axis=-1, keepdims=True))
    alpha = jnp.exp(m_prev - m_new)
    p = jnp.exp(s - m_new)                       # f32 softmax (v5e-safe)
    l_ref[...] = alpha * l_ref[...] + jnp.sum(p, axis=-1, keepdims=True)
    acc_ref[...] = alpha * acc_ref[...] + lax.dot_general(
        p.astype(v.dtype), v, dimension_numbers=(((1,), (0,)), ((), ())),
        preferred_element_type=jnp.float32)
    m_ref[...] = m_new

    @pl.when(kv == pl.num_programs(2) - 1)
    def _finalize():
        o_ref[0] = (acc_ref[...] *
                    pl.reciprocal(l_ref[...], approx=True)).astype(o_ref.dtype)


def _attn_kernel_nomask(q_ref, k_ref, v_ref, o_ref, m_ref, l_ref, acc_ref):
    _attn_step(q_ref, k_ref, v_ref, None, o_ref, m_ref, l_ref, acc_ref)


def _attn_kernel_masked(q_ref, k_ref, v_ref, mask_ref, o_ref, m_ref, l_ref,
                        acc_ref):
    _attn_step(q_ref, k_ref, v_ref, mask_ref, o_ref, m_ref, l_ref, acc_ref)


def _flash_tiles(B, Lq, Lk, d_pad, out_bytes, mask_full):
    """Pick the largest (tq, tk) under the VMEM budget; K/V HBM traffic ~ Lq/tq,
    so tq is maximized first."""
    def est(tq, tk):
        blocks = (2 * tq * d_pad * 2            # Q blocks (bf16, double-buffered)
                  + 4 * tk * d_pad * 2          # K + V blocks
                  + 2 * tq * d_pad * out_bytes)  # output blocks
        scratch = tq * (d_pad + 2) * 4           # acc + m + l (f32)
        temps = 3 * tq * tk * 4                  # s / p / cast temporaries
        msk = 2 * tq * tk * 4 if mask_full else 0
        return blocks + scratch + temps + msk

    # Keep B * (Lq // tq) >= 2 when B == 1 so both v7x TensorCores get work.
    q_cap = Lq if B > 1 else max(Lq // 2, 16)
    for q_target in (1024, 512, 256, 128, 64, 32, 16):
        tq = _pick_tile(Lq, min(q_target, q_cap), 16)
        for kv_target in (2048, 1024, 512, 256, 128):
            tk = _pick_tile(Lk, kv_target, 128)
            if tq * tk <= (1 << 20) and est(tq, tk) <= _VMEM_BUDGET:
                return tq, tk
    return _pick_tile(Lq, 16, 16), _pick_tile(Lk, 128, 128)


def _flash_attention(q, k, v, mask, out_dtype):
    B, Lq, d_pad = q.shape
    _, Lk, _ = k.shape

    mask_full = mask is not None and mask.shape[1] != 1
    tq, tk = _flash_tiles(B, Lq, Lk, d_pad, jnp.dtype(out_dtype).itemsize,
                          mask_full)
    grid = (B, Lq // tq, Lk // tk)

    in_specs = [
        pl.BlockSpec((1, tq, d_pad), lambda b, qi, ki: (b, qi, 0)),
        pl.BlockSpec((1, tk, d_pad), lambda b, qi, ki: (b, ki, 0)),
        pl.BlockSpec((1, tk, d_pad), lambda b, qi, ki: (b, ki, 0)),
    ]
    operands = [q, k, v]

    if mask is None:
        kernel = _attn_kernel_nomask
    else:
        kernel = _attn_kernel_masked
        mb, mq, _ = mask.shape
        if mq == 1:                                      # key-padding mask
            if mb == 1:
                spec = pl.BlockSpec((1, 1, tk), lambda b, qi, ki: (0, 0, ki))
            else:
                spec = pl.BlockSpec((1, 1, tk), lambda b, qi, ki: (b, 0, ki))
        else:                                            # full (Lq, Lk) mask
            if mb == 1:
                spec = pl.BlockSpec((1, tq, tk), lambda b, qi, ki: (0, qi, ki))
            else:
                spec = pl.BlockSpec((1, tq, tk), lambda b, qi, ki: (b, qi, ki))
        in_specs.append(spec)
        operands.append(mask)

    return pl.pallas_call(
        kernel,
        out_shape=jax.ShapeDtypeStruct((B, Lq, d_pad), out_dtype),
        grid_spec=pltpu.PrefetchScalarGridSpec(
            num_scalar_prefetch=0,
            grid=grid,
            in_specs=in_specs,
            out_specs=pl.BlockSpec((1, tq, d_pad),
                                   lambda b, qi, ki: (b, qi, 0)),
            scratch_shapes=[pltpu.VMEM((tq, 1), jnp.float32),       # m
                            pltpu.VMEM((tq, 1), jnp.float32),       # l
                            pltpu.VMEM((tq, d_pad), jnp.float32)],  # acc
        ),
        compiler_params=pltpu.CompilerParams(
            dimension_semantics=("parallel", "parallel", "arbitrary"),
            vmem_limit_bytes=_VMEM_LIMIT),
    )(*operands)


# ---------------------------------------------------------------------------
# Public wrapper (matches DotProductAttention.forward semantics)
# ---------------------------------------------------------------------------
def dot_product_attention(x_query, x_key, x_value, w_query, w_key, w_value,
                          mask=None):
    """x_query: (B, Lq, d_model); x_key/x_value: (B, Lk, d_model)
    w_*: (d_head, d_model)  -- PyTorch nn.Linear weight layout.
    mask: optional additive mask broadcastable to (B, Lq, Lk)."""
    B, Lq, d_model = x_query.shape
    _, Lk, _ = x_key.shape
    d_head = w_query.shape[0]
    out_dtype = x_query.dtype
    scale = 1.0 / sqrt(d_head)
    d_pad = max(_round_up(d_head, 128), 128)   # lane-dense head dim

    def prep_weight(w, s=1.0):
        wt = (jnp.asarray(w, jnp.float32) * s).T          # (d_model, d_head)
        if d_pad != d_head:
            wt = jnp.pad(wt, ((0, 0), (0, d_pad - d_head)))
        return wt.astype(jnp.bfloat16)

    wq_t = prep_weight(w_query, scale)   # 1/sqrt(d_head) folded into Wq
    wk_t = prep_weight(w_key)
    wv_t = prep_weight(w_value)

    # Fused projections (wider MXU N dim; read x once) where inputs are shared.
    if x_query is x_key and x_key is x_value:
        qkv = _project(x_query, jnp.concatenate([wq_t, wk_t, wv_t], axis=1))
        q = qkv[..., :d_pad]
        k = qkv[..., d_pad:2 * d_pad]
        v = qkv[..., 2 * d_pad:]
    elif x_key is x_value:
        q = _project(x_query, wq_t)
        kv = _project(x_key, jnp.concatenate([wk_t, wv_t], axis=1))
        k = kv[..., :d_pad]
        v = kv[..., d_pad:]
    else:
        q = _project(x_query, wq_t)
        k = _project(x_key, wk_t)
        v = _project(x_value, wv_t)

    m = None
    if mask is not None:
        m = jnp.asarray(mask, jnp.float32)     # keep f32 (safe for ALiBi-style biases)
        if m.ndim == 2:
            m = m[None]
        if m.ndim != 3 or m.shape[0] not in (1, B):
            raise ValueError(f"mask shape {jnp.shape(mask)} not broadcastable "
                             f"to ({B}, {Lq}, {Lk})")
        if m.shape[2] == 1 and Lk != 1:
            m = jnp.broadcast_to(m, (m.shape[0], m.shape[1], Lk))
        if m.shape[1] not in (1, Lq) or m.shape[2] != Lk:
            raise ValueError(f"mask shape {jnp.shape(mask)} not broadcastable "
                             f"to ({B}, {Lq}, {Lk})")
        # Intentionally NOT broadcast to (B, Lq, Lk): batch / query broadcast is
        # handled by the BlockSpec index_map and the in-kernel add.

    out = _flash_attention(q, k, v, m, out_dtype)
    if d_pad != d_head:
        out = out[..., :d_head]
    return out


# ---------------------------------------------------------------------------
# Reference + self-test
# ---------------------------------------------------------------------------
def _reference(x_query, x_key, x_value, w_query, w_key, w_value, mask=None):
    d_head = w_query.shape[0]
    q = x_query @ w_query.T
    k = x_key @ w_key.T
    v = x_value @ w_value.T
    scores = (q @ jnp.swapaxes(k, -2, -1)) / sqrt(d_head)
    if mask is not None:
        scores = scores + mask
    return jax.nn.softmax(scores, axis=-1) @ v


if __name__ == "__main__":
    key = jax.random.PRNGKey(0)
    B, Lq, Lk, d_model, d_head = 2, 8, 8, 32, 16
    dtype = jnp.float32

    k1, k2, k3, k4, k5, k6 = jax.random.split(key, 6)
    x_query = jax.random.normal(k1, (B, Lq, d_model), dtype)
    x_key = jax.random.normal(k2, (B, Lk, d_model), dtype)
    x_value = jax.random.normal(k3, (B, Lk, d_model), dtype)

    bound = 1.0 / sqrt(d_model)
    w_query = jax.random.uniform(k4, (d_head, d_model), dtype, -bound, bound)
    w_key = jax.random.uniform(k5, (d_head, d_model), dtype, -bound, bound)
    w_value = jax.random.uniform(k6, (d_head, d_model), dtype, -bound, bound)

    tol = dict(atol=2e-2, rtol=2e-2)   # bf16 MXU operands + approx reciprocal

    # --- no-mask path ---
    out = dot_product_attention(x_query, x_key, x_value,
                                w_query, w_key, w_value, mask=None)
    out = jax.block_until_ready(out)
    ref = _reference(x_query, x_key, x_value, w_query, w_key, w_value)
    assert out.shape == (B, Lq, d_head)
    assert jnp.allclose(out, ref, **tol), "mismatch (no mask)"

    # --- full additive mask, batch-broadcast (1, Lq, Lk), kept in f32 ---
    causal = jnp.where(jnp.tril(jnp.ones((Lq, Lk), bool)), 0.0, -1e9)
    mask_full = causal.astype(jnp.float32)[None]
    out_m = dot_product_attention(x_query, x_key, x_value,
                                  w_query, w_key, w_value, mask=mask_full)
    out_m = jax.block_until_ready(out_m)
    ref_m = _reference(x_query, x_key, x_value, w_query, w_key, w_value,
                       mask_full)
    assert jnp.allclose(out_m, ref_m, **tol), "mismatch (full mask)"

    # --- key-padding mask (B, 1, Lk): broadcast in-kernel, never materialized ---
    lens = jnp.array([Lk, 5])
    keypad = jnp.where(jnp.arange(Lk)[None, :] < lens[:, None], 0.0, -1e9)
    keypad = keypad.astype(jnp.float32)[:, None, :]          # (B, 1, Lk)
    out_p = dot_product_attention(x_query, x_key, x_value,
                                  w_query, w_key, w_value, mask=keypad)
    out_p = jax.block_until_ready(out_p)
    ref_p = _reference(x_query, x_key, x_value, w_query, w_key, w_value, keypad)
    assert jnp.allclose(out_p, ref_p, **tol), "mismatch (key-padding mask)"

    # --- self-attention (fused QKV projection path) ---
    out_s = dot_product_attention(x_query, x_query, x_query,
                                  w_query, w_key, w_value, mask=None)
    out_s = jax.block_until_ready(out_s)
    ref_s = _reference(x_query, x_query, x_query, w_query, w_key, w_value)
    assert jnp.allclose(out_s, ref_s, **tol), "mismatch (fused self-attention)"

    print("KERNEL_OK")
</pallas_src>

<mosaic_0001>
module attributes {stable_mosaic.version = 11 : i64} {
  func.func @_proj_kernel(%arg0: i32, %arg1: i32, %arg2: memref<16x32xf32, #tpu.memory_space<vmem>>, %arg3: memref<32x128xbf16, #tpu.memory_space<vmem>>, %arg4: memref<16x128xbf16, #tpu.memory_space<vmem>>, %arg5: memref<16x128xf32, #tpu.memory_space<vmem>>) attributes {dimension_semantics = [#tpu.dimension_semantics<parallel>, #tpu.dimension_semantics<arbitrary>], iteration_bounds = array<i64: 1, 1>, scalar_prefetch = 0 : i64, scratch_operands = 1 : i64, tpu.core_type = #tpu.core_type<tc>, window_params = [{transform_indices = @transform_0, window_bounds = array<i64: 16, 32>}, {transform_indices = @transform_1, window_bounds = array<i64: 32, 128>}, {transform_indices = @transform_2, window_bounds = array<i64: 16, 128>}]} {
    %c0_i32 = arith.constant 0 : i32
    %0 = arith.cmpi eq, %arg1, %c0_i32 : i32
    %1 = arith.extui %0 : i1 to i32
    %c0_i32_0 = arith.constant 0 : i32
    %2 = arith.cmpi ne, %1, %c0_i32_0 : i32
    scf.if %2 {
      %cst_10 = arith.constant 0.000000e+00 : f32
      %13 = vector.broadcast %cst_10 : f32 to vector<16x128xf32>
      %c0_11 = arith.constant 0 : index
      %c0_12 = arith.constant 0 : index
      %14 = vector.load %arg5[%c0_11, %c0_12] : memref<16x128xf32, #tpu.memory_space<vmem>>, vector<16x128xf32>
      tpu.vector_store %arg5[%c0_11, %c0_12], %13 {strides = array<i32>} : memref<16x128xf32, #tpu.memory_space<vmem>>, vector<16x128xf32>,
    } else {
    }
    %c0 = arith.constant 0 : index
    %c0_1 = arith.constant 0 : index
    %3 = vector.load %arg5[%c0, %c0_1] : memref<16x128xf32, #tpu.memory_space<vmem>>, vector<16x128xf32>
    %c0_2 = arith.constant 0 : index
    %c0_3 = arith.constant 0 : index
    %4 = vector.load %arg2[%c0_2, %c0_3] : memref<16x32xf32, #tpu.memory_space<vmem>>, vector<16x32xf32>
    %5 = arith.truncf %4 : vector<16x32xf32> to vector<16x32xbf16>
    %c0_4 = arith.constant 0 : index
    %c0_5 = arith.constant 0 : index
    %6 = vector.load %arg3[%c0_4, %c0_5] : memref<32x128xbf16, #tpu.memory_space<vmem>>, vector<32x128xbf16>
    %cst = arith.constant dense<0.000000e+00> : vector<16x128xf32>
    %7 = tpu.matmul %5, %6, %cst {dimension_numbers = #tpu.dot_dimension_numbers<[1], [0], [0], [1], [0, 0, 1, 1], [], []>} : vector<16x32xbf16>, vector<32x128xbf16>, vector<16x128xf32> -> vector<16x128xf32>
    %8 = arith.addf %3, %7 : vector<16x128xf32>
    %c0_6 = arith.constant 0 : index
    %c0_7 = arith.constant 0 : index
    %9 = vector.load %arg5[%c0_6, %c0_7] : memref<16x128xf32, #tpu.memory_space<vmem>>, vector<16x128xf32>
    tpu.vector_store %arg5[%c0_6, %c0_7], %8 {strides = array<i32>} : memref<16x128xf32, #tpu.memory_space<vmem>>, vector<16x128xf32>,
    %c0_i32_8 = arith.constant 0 : i32
    %10 = arith.cmpi eq, %arg1, %c0_i32_8 : i32
    %11 = arith.extui %10 : i1 to i32
    %c0_i32_9 = arith.constant 0 : i32
    %12 = arith.cmpi ne, %11, %c0_i32_9 : i32
    scf.if %12 {
      %c0_10 = arith.constant 0 : index
      %c0_11 = arith.constant 0 : index
      %13 = vector.load %arg5[%c0_10, %c0_11] : memref<16x128xf32, #tpu.memory_space<vmem>>, vector<16x128xf32>
      %14 = arith.truncf %13 : vector<16x128xf32> to vector<16x128xbf16>
      %c0_12 = arith.constant 0 : index
      %c0_13 = arith.constant 0 : index
      %15 = vector.load %arg4[%c0_12, %c0_13] : memref<16x128xbf16, #tpu.memory_space<vmem>>, vector<16x128xbf16>
      tpu.vector_store %arg4[%c0_12, %c0_13], %14 {strides = array<i32>} : memref<16x128xbf16, #tpu.memory_space<vmem>>, vector<16x128xbf16>,
    } else {
    }
    return
  }
  func.func @transform_0(%arg0: i32, %arg1: i32) -> (i32, i32) {
    %c0_i32 = arith.constant 0 : i32
    return %arg0, %arg1 : i32, i32
  }
  func.func @transform_1(%arg0: i32, %arg1: i32) -> (i32, i32) {
    %c0_i32 = arith.constant 0 : i32
    %c0_i32_0 = arith.constant 0 : i32
    return %arg1, %c0_i32 : i32, i32
  }
  func.func @transform_2(%arg0: i32, %arg1: i32) -> (i32, i32) {
    %c0_i32 = arith.constant 0 : i32
    %c0_i32_0 = arith.constant 0 : i32
    return %arg0, %c0_i32 : i32, i32
  }
}

</mosaic_0001>

<llo_original>
// kernel: tpu_custom_call.1
$region0: #{tpu_custom_call.1}
  #allocation0 [shape = 'u32[]', space=smem, size = 0x4, offset = 0x4, fixed_abs, tag = 'smem constant byte address 0x4 - core index']
  #allocation1 [shape = 'u32[72,128]{1,0:T(1,128)}', space=vmem, size = 0x9000, scoped, tag = 'internal scratch']
  #allocation2 [shape = 'f32[16,128]{1,0:T(8,128)}', space=vmem, size = 0x2000, scoped, tag = 'scratch operand']
  %s0 = inlined_call_operand.hbm [shape: f32[16,32], index: 0, kind: input, shape index: {}]
  %s1 = inlined_call_operand.hbm [shape: bf16[32,128], index: 1, kind: input, shape index: {}]
  %s2 = inlined_call_operand.hbm [shape: bf16[16,128], index: 2, kind: output, shape index: {}]
  %s3 = sld [smem:[#allocation0]]
  $region34: #{tpu_custom_call.1} parent=0
    _
  %s5 = ssub.s32 1, %s3
  %s6 = scalar_select 0, %s5, %s3
  $region1: #{tpu_custom_call.1} parent=0
    #allocation3 [shape = 'u8[8192]{0}', space=vmem, size = 0x2000, scoped, tag = 'input window, operand 0, single buffered']
    #allocation4 [shape = 's32[1]{0}', space=sflag, size = 0x4, scoped, tag = 'scoped memory for tpu_custom_call.1']
    #allocation5 [shape = 's32[1]{0}', space=sflag, size = 0x4, scoped, tag = 'scoped memory for tpu_custom_call.1']
    #allocation6 [shape = 'u8[8192]{0}', space=vmem, size = 0x2000, scoped, tag = 'input window, operand 1, single buffered']
    #allocation7 [shape = 's32[1]{0}', space=sflag, size = 0x4, scoped, tag = 'scoped memory for tpu_custom_call.1']
    #allocation8 [shape = 'u8[4096]{0}', space=vmem, size = 0x1000, scoped, tag = 'output window, operand 0, single buffered']
    %7 = vsyncpa [#allocation4], 0
    %8 = vsyncpa [#allocation7], 0
    %9 = vsyncpa [#allocation5], 0
    // Predicated region
    $region2: #{tpu_custom_call.1} parent=1 // pred_check
      _
    $region3: #{tpu_custom_call.1} parent=1 // pred_check_branch
      %11 = sbr.rel (0) target = $region5
    $region4: #{tpu_custom_call.1} parent=1 // pred_region
      %13 = vsyncadd [#allocation4], 0
      %s14 = sshll.u32 %s0, 4
      %s15 = int_to_ptr.hbm [resolvable:$true] %s14
      %s16 = sshll.u32 [#allocation3], 4
      %s17 = int_to_ptr.vmem [resolvable:$true] %s16
      %22 = dma.hbm_to_vmem [thread:$0]  %s15, 256, %s17, [#allocation4], 128, 128, 8
    $region5: #{tpu_custom_call.1} parent=1 // pred_fallthru
      _
    // Predicated region
    $region6: #{tpu_custom_call.1} parent=1 // pred_check
      _
    $region7: #{tpu_custom_call.1} parent=1 // pred_check_branch
      %24 = sbr.rel (0) target = $region9
    $region8: #{tpu_custom_call.1} parent=1 // pred_region
      %26 = vsyncadd [#allocation7], 0
      %s27 = sshll.u32 %s1, 4
      %s28 = int_to_ptr.hbm [resolvable:$true] %s27
      %s29 = sshll.u32 [#allocation6], 4
      %s30 = int_to_ptr.vmem [resolvable:$true] %s29
      %35 = dma.hbm_to_vmem [thread:$0]  %s28, 256, %s30, [#allocation7], 64, 64, 4
    $region9: #{tpu_custom_call.1} parent=1 // pred_fallthru
      _
    // Predicated region
    $region10: #{tpu_custom_call.1} parent=1 // pred_check
      _
    $region11: #{tpu_custom_call.1} parent=1 // pred_check_branch
      %37 = sbr.rel (0) target = $region13
    $region12: #{tpu_custom_call.1} parent=1 // pred_region
      %39 = dma.done [#allocation4], 256
    $region13: #{tpu_custom_call.1} parent=1 // pred_fallthru
      _
    // Predicated region
    $region14: #{tpu_custom_call.1} parent=1 // pred_check
      _
    $region15: #{tpu_custom_call.1} parent=1 // pred_check_branch
      %41 = sbr.rel (0) target = $region17
    $region16: #{tpu_custom_call.1} parent=1 // pred_region
      %43 = dma.done [#allocation7], 256
    $region17: #{tpu_custom_call.1} parent=1 // pred_fallthru
      _
    %p45 = scmp.eq.s32.totalorder 0, 0
    // Predicated region
    $region18: #{tpu_custom_call.1} parent=1 // pred_check
      %p46 = pneg %p45
    $region19: #{tpu_custom_call.1} parent=1 // pred_check_branch
      %48 = sbr.rel (%p46) target = $region21
    $region20: #{tpu_custom_call.1} parent=1 // pred_region
      %49 = vst [vmem:[#allocation2] sm:$0xff] 0.0
      %50 = vst [vmem:[#allocation2 + $0x8] sm:$0xff] 0.0
    $region21: #{tpu_custom_call.1} parent=1 // pred_fallthru
      _
    %v51 = vld [vmem:[#allocation2] sm:$0xff]
    %v52 = vld [vmem:[#allocation2 + $0x8] sm:$0xff]
    %v53 = vld [vmem:[#allocation3] sm:$0xff]
    %v54 = vld [vmem:[#allocation3 + $0x8] sm:$0xff]
    %v55 = vpack.c.bf16 %v54, %v53
    %v56 = vld [vmem:[#allocation6] sm:$0xf]
    %v57 = vld [vmem:[#allocation6 + $0x4] sm:$0xf]
    %v58 = vld [vmem:[#allocation6 + $0x8] sm:$0xf]
    %v59 = vld [vmem:[#allocation6 + $0xc] sm:$0xf]
    %v64 = vunpack.c.l.b16 %v56
    %v65 = vunpack.c.l.b16 %v57
    %v66 = vunpack.c.l.b16 %v58
    %v67 = vunpack.c.l.b16 %v59
    %v68 = vpack.c.b16 %v65, %v64
    %v69 = vpack.c.b16 %v67, %v66
    %vm72 = vcmask 261120
    %v74 = vsel %vm72, %v55, 0
    %76 = vmatpush.bf16.msra.mxu0 0
    %77 = vmatpush.bf16.msra.mxu0 0
    %78 = vmatpush.bf16.msra.mxu0 0
    %79 = vmatpush.bf16.msra.mxu0 0
    %80 = vmatpush.bf16.msra.mxu0 0
    %81 = vmatpush.bf16.msra.mxu0 0
    %82 = vmatpush.bf16.msra.mxu0 %v69
    %83 = vmatpush.bf16.msra.mxu0 %v68
    %84 = vmatmul.bf16.gmra.mxu0 %v74
    %v85 = vpop.f32.mrf.mxu0
    %v86 = vadd.f32 0.0, %v85
    %v87 = vpop.f32.mrf.mxu0
    %v88 = vadd.f32 0.0, %v87
    %89 = vdwg.mxu0
    %v90 = vadd.f32 %v51, %v86
    %v91 = vadd.f32 %v52, %v88
    %92 = vst [vmem:[#allocation2] sm:$0xff] %v90
    %93 = vst [vmem:[#allocation2 + $0x8] sm:$0xff] %v91
    // Predicated region
    $region22: #{tpu_custom_call.1} parent=1 // pred_check
      %p94 = pneg %p45
    $region23: #{tpu_custom_call.1} parent=1 // pred_check_branch
      %96 = sbr.rel (%p94) target = $region25
    $region24: #{tpu_custom_call.1} parent=1 // pred_region
      %v97 = vld [vmem:[#allocation2] sm:$0xff]
      %v98 = vld [vmem:[#allocation2 + $0x8] sm:$0xff]
      %v99 = vpack.c.bf16 %v97, %v97
      %v100 = vpack.c.bf16 %v98, %v98
      %101 = vst [vmem:[#allocation8] sm:$0xf] %v99
      %102 = vst [vmem:[#allocation8 + $0x4] sm:$0xf] %v100
    $region25: #{tpu_custom_call.1} parent=1 // pred_fallthru
      _
    // Predicated region
    $region26: #{tpu_custom_call.1} parent=1 // pred_check
      _
    $region27: #{tpu_custom_call.1} parent=1 // pred_check_branch
      %104 = sbr.rel (0) target = $region29
    $region28: #{tpu_custom_call.1} parent=1 // pred_region
      %106 = vsyncadd [#allocation5], 0
      %s107 = sshll.u32 [#allocation8], 4
      %s108 = int_to_ptr.vmem [resolvable:$true] %s107
      %s109 = sshll.u32 %s2, 4
      %s110 = int_to_ptr.hbm [resolvable:$true] %s109
      %115 = dma.vmem_to_hbm [thread:$0]  %s108, 128, %s110, [#allocation5], 64, 64, 4
    $region29: #{tpu_custom_call.1} parent=1 // pred_fallthru
      _
    // Predicated region
    $region30: #{tpu_custom_call.1} parent=1 // pred_check
      _
    $region31: #{tpu_custom_call.1} parent=1 // pred_check_branch
      %117 = sbr.rel (0) target = $region33
    $region32: #{tpu_custom_call.1} parent=1 // pred_region
      %119 = dma.done [#allocation5], 128
    $region33: #{tpu_custom_call.1} parent=1 // pred_fallthru
      _
    %120 = vsyncpa [#allocation4], 1
    %121 = vsyncpa [#allocation7], 1
    %122 = vsyncpa [#allocation5], 1

</llo_original>
